<compile_context>
chip_gen: v7x
topology: tpu7x:2x2x1
jax: 0.10.0
libtpu: 0.0.40
codegen_flags: <defaults>
</compile_context>

<pallas_src>
import functools

import jax
import jax.numpy as jnp
from jax.experimental import pallas as pl
from jax.experimental.pallas import tpu as pltpu

EPS = 1e-5


# ----------------------------------------------------------------------------- kernel
def _hrb_kernel(x_ref, vec_ref, w1t_ref, w2t_ref, o_ref):
    """Fused eval-mode forward.

    vec rows: 0 = bn1 scale, 1 = bn1 shift,
              2 = post-fc1 shift (fc1_bias * bn2_scale + bn2_shift),
              3 = fc2 bias.
    bn2's scale is pre-folded into the columns of w1t.
    """
    vec = vec_ref[...]                                  # (8, Dp) f32, VMEM-resident
    s1, t1 = vec[0:1, :], vec[1:2, :]
    c1, b2 = vec[2:3, :], vec[3:4, :]

    # bn1 (folded) + relu    (dropout == identity in eval mode)
    h = jnp.maximum(x_ref[...].astype(jnp.float32) * s1 + t1, 0.0)

    # fc1 with bn2 scale folded into weight columns, then shift + relu.
    h = jnp.dot(h.astype(jnp.bfloat16), w1t_ref[...],
                preferred_element_type=jnp.float32)
    h = jnp.maximum(h + c1, 0.0)

    # fc2
    h = jnp.dot(h.astype(jnp.bfloat16), w2t_ref[...],
                preferred_element_type=jnp.float32)

    # residual: re-read x from the VMEM input buffer instead of keeping the f32
    # tile live in vregs across both MXU ops.
    o_ref[...] = (h + b2 + x_ref[...].astype(jnp.float32)).astype(o_ref.dtype)


# ----------------------------------------------------------------------------- param prep (once, offline)
def prepare_params(params, mm_dtype=jnp.bfloat16):
    """Fold bn1 -> scale/shift, fold bn2 INTO fc1, pack per-feature vectors,
    transpose + cast + zero-pad weights. Done once per model, NOT per call."""
    D = params["fc1_w"].shape[0]
    D_pad = ((D + 127) // 128) * 128                     # lane-dense feature dim

    def fold_bn(g, b, m, v):
        s = g.astype(jnp.float32) * jax.lax.rsqrt(v.astype(jnp.float32) + EPS)
        return s, b.astype(jnp.float32) - m.astype(jnp.float32) * s

    s1, t1 = fold_bn(params["bn1_gamma"], params["bn1_beta"],
                     params["bn1_mean"], params["bn1_var"])
    s2, t2 = fold_bn(params["bn2_gamma"], params["bn2_beta"],
                     params["bn2_mean"], params["bn2_var"])

    b1 = params["fc1_b"].astype(jnp.float32)
    b2 = params["fc2_b"].astype(jnp.float32)
    c1 = b1 * s2 + t2                                    # post-fc1 shift (bn2 folded)

    vec = jnp.zeros((8, D_pad), jnp.float32)
    for r, row in enumerate([s1, t1, c1, b2]):
        vec = vec.at[r, :D].set(row)

    def pad_wt(wt_f32):                                  # (in, out) bf16, zero-padded
        out = jnp.zeros((D_pad, D_pad), mm_dtype)
        return out.at[:D, :D].set(wt_f32.astype(mm_dtype))

    w1t = params["fc1_w"].T.astype(jnp.float32) * s2[None, :]   # fold bn2 scale
    w2t = params["fc2_w"].T.astype(jnp.float32)

    return {
        "vec": vec,
        "w1t": pad_wt(w1t),
        "w2t": pad_wt(w2t),
        "D": D,
        "D_pad": D_pad,
    }


# ----------------------------------------------------------------------------- sizing helpers
def _pick_tm(N_pad, D_pad, tm=None):
    if tm is None:
        target_bytes = 2 << 20                           # ~2 MiB per input buffer
        tm = max(64, target_bytes // (D_pad * 4))
    tm = max(8, (int(tm) // 8) * 8)
    # Ensure >= 2 grid steps so the "parallel" batch axis can shard across the
    # two TensorCores on v7x (free on v5e/v6e).
    if N_pad >= 16:
        tm = min(tm, max(8, ((N_pad // 2 + 7) // 8) * 8))
    return int(min(tm, N_pad))


def _vmem_limit_bytes(tm, D_pad, x_itemsize, w_itemsize):
    w_bytes = 2 * D_pad * D_pad * w_itemsize             # w1t + w2t, single-buffered
    vec_bytes = 8 * D_pad * 4                            # single-buffered
    tile_bytes = tm * D_pad * x_itemsize
    need = w_bytes + vec_bytes + 2 * 2 * tile_bytes      # in/out tiles double-buffered
    try:
        cap = int(pltpu.get_tpu_info().vmem_capacity_bytes)
    except Exception:
        cap = 64 << 20                                   # conservative (v7x per-TC)
    limit = int(min(max(need + (4 << 20), 16 << 20), cap - (8 << 20)))
    if need + (2 << 20) > limit:
        # TODO(synk): K-tiled weight-streaming fallback for very large D.
        raise ValueError(
            f"weights do not fit fully VMEM-resident (need ~{need >> 20} MiB, "
            f"VMEM ~{cap >> 20} MiB); reduce dim or add a K-tiled path")
    return limit


# ----------------------------------------------------------------------------- wrapper
@functools.partial(jax.jit, static_argnames=("tm", "vmem_limit"))
def _hrb_call(x_in, vec, w1t, w2t, tm, vmem_limit):
    N_pad, D_pad = x_in.shape
    grid = (pl.cdiv(N_pad, tm),)

    def resident(shape):
        # Grid-invariant operand: keep a single VMEM buffer (no wasted 2nd buffer).
        try:
            return pl.BlockSpec(shape, lambda i: (0, 0), pipeline_mode=pl.Buffered(1))
        except TypeError:                                # older jax: no pipeline_mode
            return pl.BlockSpec(shape, lambda i: (0, 0))

    return pl.pallas_call(
        _hrb_kernel,
        out_shape=jax.ShapeDtypeStruct((N_pad, D_pad), x_in.dtype),
        grid=grid,
        in_specs=[
            pl.BlockSpec((tm, D_pad), lambda i: (i, 0)),  # x: tiled over batch
            resident((8, D_pad)),                         # packed per-feature vec
            resident((D_pad, D_pad)),                     # W1'^T (bn2-folded, bf16)
            resident((D_pad, D_pad)),                     # W2^T (bf16)
        ],
        out_specs=pl.BlockSpec((tm, D_pad), lambda i: (i, 0)),
        compiler_params=pltpu.CompilerParams(
            dimension_semantics=("parallel",),
            vmem_limit_bytes=vmem_limit,
        ),
    )(x_in, vec, w1t, w2t)


def hierarchical_residual_block(x, prepped, tm=None):
    N, D = x.shape
    assert D == prepped["D"]
    D_pad = prepped["D_pad"]

    N_pad = ((N + 7) // 8) * 8
    tm = _pick_tm(N_pad, D_pad, tm)
    vmem_limit = _vmem_limit_bytes(tm, D_pad, jnp.dtype(x.dtype).itemsize,
                                   jnp.dtype(prepped["w1t"].dtype).itemsize)

    if (N_pad, D_pad) != (N, D):
        x_in = jnp.zeros((N_pad, D_pad), x.dtype).at[:N, :D].set(x)
    else:
        x_in = x

    out = _hrb_call(x_in, prepped["vec"], prepped["w1t"], prepped["w2t"], tm, vmem_limit)

    if (N_pad, D_pad) != (N, D):
        out = out[:N, :D]
    return out


# ----------------------------------------------------------------------------- references
def _reference_f32(x, p):
    """Pure-JAX f32 reference matching PyTorch eval-mode forward."""
    def bn(h, g, b, m, v):
        return (h - m) / jnp.sqrt(v + EPS) * g + b

    h = jnp.maximum(bn(x, p["bn1_gamma"], p["bn1_beta"], p["bn1_mean"], p["bn1_var"]), 0.0)
    h = h @ p["fc1_w"].T + p["fc1_b"]
    h = jnp.maximum(bn(h, p["bn2_gamma"], p["bn2_beta"], p["bn2_mean"], p["bn2_var"]), 0.0)
    h = h @ p["fc2_w"].T + p["fc2_b"]
    return h + x


def _reference_bf16_mm(x, p):
    """Reference using the same bf16-matmul / bn2-folded math as the kernel."""
    def fold(g, b, m, v):
        s = g * jax.lax.rsqrt(v + EPS)
        return s, b - m * s

    s1, t1 = fold(p["bn1_gamma"], p["bn1_beta"], p["bn1_mean"], p["bn1_var"])
    s2, t2 = fold(p["bn2_gamma"], p["bn2_beta"], p["bn2_mean"], p["bn2_var"])
    w1t = (p["fc1_w"].T * s2[None, :]).astype(jnp.bfloat16)
    w2t = p["fc2_w"].T.astype(jnp.bfloat16)

    h = jnp.maximum(x * s1 + t1, 0.0)
    h = jnp.dot(h.astype(jnp.bfloat16), w1t, preferred_element_type=jnp.float32)
    h = jnp.maximum(h + (p["fc1_b"] * s2 + t2), 0.0)
    h = jnp.dot(h.astype(jnp.bfloat16), w2t, preferred_element_type=jnp.float32)
    return h + p["fc2_b"] + x


def _init_params(key, dim):
    ks = jax.random.split(key, 8)
    return {
        "bn1_gamma": jax.random.uniform(ks[0], (dim,), jnp.float32, 0.5, 1.5),
        "bn1_beta": jax.random.normal(ks[1], (dim,), jnp.float32) * 0.1,
        "bn1_mean": jax.random.normal(ks[2], (dim,), jnp.float32) * 0.1,
        "bn1_var": jax.random.uniform(ks[3], (dim,), jnp.float32, 0.5, 1.5),
        "fc1_w": jax.random.normal(ks[4], (dim, dim), jnp.float32) * (1.0 / jnp.sqrt(dim)),
        "fc1_b": jax.random.normal(ks[5], (dim,), jnp.float32) * 0.05,
        "bn2_gamma": jax.random.uniform(ks[6], (dim,), jnp.float32, 0.5, 1.5),
        "bn2_beta": jax.random.normal(ks[7], (dim,), jnp.float32) * 0.1,
        "bn2_mean": jnp.zeros((dim,), jnp.float32),
        "bn2_var": jnp.ones((dim,), jnp.float32),
        "fc2_w": jax.random.normal(jax.random.fold_in(key, 42), (dim, dim), jnp.float32)
                 * (1.0 / jnp.sqrt(dim)),
        "fc2_b": jax.random.normal(jax.random.fold_in(key, 43), (dim,), jnp.float32) * 0.05,
    }


if __name__ == "__main__":
    key = jax.random.PRNGKey(0)

    # (N, D, tm): multi-tile lane-dense case (auto tm), tiny padded case, explicit tm.
    cases = [(256, 128, None), (10, 32, None), (64, 128, 32)]
    for (N, D, tm) in cases:
        k_x, k_p = jax.random.split(jax.random.fold_in(key, D * 1000 + N))
        x = jax.random.normal(k_x, (N, D), jnp.float32)
        params = _init_params(k_p, D)

        prepped = prepare_params(params)          # one-time param prep
        out = hierarchical_residual_block(x, prepped, tm=tm)
        out = jax.block_until_ready(out)
        assert out.shape == (N, D)

        ref_mm = _reference_bf16_mm(x, params)    # same math as kernel
        ref_32 = _reference_f32(x, params)        # full-f32 PyTorch-eval semantics

        if not jnp.allclose(out, ref_mm, atol=2e-3, rtol=2e-3):
            raise AssertionError(f"kernel mismatch vs bf16-matmul reference (N={N}, D={D})")
        if not jnp.allclose(out, ref_32, atol=5e-2, rtol=5e-2):
            raise AssertionError(f"kernel mismatch vs f32 reference (N={N}, D={D})")

    print("KERNEL_OK")
</pallas_src>

<mosaic_0001>
module attributes {stable_mosaic.version = 11 : i64} {
  func.func @_hrb_kernel(%arg0: i32, %arg1: memref<128x128xf32, #tpu.memory_space<vmem>>, %arg2: memref<8x128xf32, #tpu.memory_space<vmem>>, %arg3: memref<128x128xbf16, #tpu.memory_space<vmem>>, %arg4: memref<128x128xbf16, #tpu.memory_space<vmem>>, %arg5: memref<128x128xf32, #tpu.memory_space<vmem>>) attributes {dimension_semantics = [#tpu.dimension_semantics<parallel>], iteration_bounds = array<i64: 2>, scalar_prefetch = 0 : i64, scratch_operands = 0 : i64, tpu.core_type = #tpu.core_type<tc>, window_params = [{transform_indices = @transform_0, window_bounds = array<i64: 128, 128>}, {pipeline_mode = #tpu.pipeline_mode<synchronous>, transform_indices = @transform_1, window_bounds = array<i64: 8, 128>}, {pipeline_mode = #tpu.pipeline_mode<synchronous>, transform_indices = @transform_2, window_bounds = array<i64: 128, 128>}, {pipeline_mode = #tpu.pipeline_mode<synchronous>, transform_indices = @transform_3, window_bounds = array<i64: 128, 128>}, {transform_indices = @transform_4, window_bounds = array<i64: 128, 128>}]} {
    %c0 = arith.constant 0 : index
    %c0_0 = arith.constant 0 : index
    %0 = vector.load %arg2[%c0, %c0_0] : memref<8x128xf32, #tpu.memory_space<vmem>>, vector<8x128xf32>
    %1 = vector.extract_strided_slice %0 {offsets = [0, 0], sizes = [1, 128], strides = [1, 1]} : vector<8x128xf32> to vector<1x128xf32>
    %2 = vector.extract_strided_slice %0 {offsets = [1, 0], sizes = [1, 128], strides = [1, 1]} : vector<8x128xf32> to vector<1x128xf32>
    %3 = vector.extract_strided_slice %0 {offsets = [2, 0], sizes = [1, 128], strides = [1, 1]} : vector<8x128xf32> to vector<1x128xf32>
    %4 = vector.extract_strided_slice %0 {offsets = [3, 0], sizes = [1, 128], strides = [1, 1]} : vector<8x128xf32> to vector<1x128xf32>
    %c0_1 = arith.constant 0 : index
    %c0_2 = arith.constant 0 : index
    %5 = vector.load %arg1[%c0_1, %c0_2] : memref<128x128xf32, #tpu.memory_space<vmem>>, vector<128x128xf32>
    %6 = vector.broadcast %1 : vector<1x128xf32> to vector<128x128xf32>
    %7 = arith.mulf %5, %6 : vector<128x128xf32>
    %8 = vector.broadcast %2 : vector<1x128xf32> to vector<128x128xf32>
    %9 = arith.addf %7, %8 : vector<128x128xf32>
    %cst = arith.constant 0.000000e+00 : f32
    %10 = vector.broadcast %cst : f32 to vector<128x128xf32>
    %11 = arith.maximumf %9, %10 : vector<128x128xf32>
    %12 = arith.truncf %11 : vector<128x128xf32> to vector<128x128xbf16>
    %c0_3 = arith.constant 0 : index
    %c0_4 = arith.constant 0 : index
    %13 = vector.load %arg3[%c0_3, %c0_4] : memref<128x128xbf16, #tpu.memory_space<vmem>>, vector<128x128xbf16>
    %cst_5 = arith.constant dense<0.000000e+00> : vector<128x128xf32>
    %14 = tpu.matmul %12, %13, %cst_5 {dimension_numbers = #tpu.dot_dimension_numbers<[1], [0], [0], [1], [0, 0, 1, 1], [], []>} : vector<128x128xbf16>, vector<128x128xbf16>, vector<128x128xf32> -> vector<128x128xf32>
    %15 = vector.broadcast %3 : vector<1x128xf32> to vector<128x128xf32>
    %16 = arith.addf %14, %15 : vector<128x128xf32>
    %cst_6 = arith.constant 0.000000e+00 : f32
    %17 = vector.broadcast %cst_6 : f32 to vector<128x128xf32>
    %18 = arith.maximumf %16, %17 : vector<128x128xf32>
    %19 = arith.truncf %18 : vector<128x128xf32> to vector<128x128xbf16>
    %c0_7 = arith.constant 0 : index
    %c0_8 = arith.constant 0 : index
    %20 = vector.load %arg4[%c0_7, %c0_8] : memref<128x128xbf16, #tpu.memory_space<vmem>>, vector<128x128xbf16>
    %cst_9 = arith.constant dense<0.000000e+00> : vector<128x128xf32>
    %21 = tpu.matmul %19, %20, %cst_9 {dimension_numbers = #tpu.dot_dimension_numbers<[1], [0], [0], [1], [0, 0, 1, 1], [], []>} : vector<128x128xbf16>, vector<128x128xbf16>, vector<128x128xf32> -> vector<128x128xf32>
    %22 = vector.broadcast %4 : vector<1x128xf32> to vector<128x128xf32>
    %23 = arith.addf %21, %22 : vector<128x128xf32>
    %c0_10 = arith.constant 0 : index
    %c0_11 = arith.constant 0 : index
    %24 = vector.load %arg1[%c0_10, %c0_11] : memref<128x128xf32, #tpu.memory_space<vmem>>, vector<128x128xf32>
    %25 = arith.addf %23, %24 : vector<128x128xf32>
    %c0_12 = arith.constant 0 : index
    %c0_13 = arith.constant 0 : index
    %26 = vector.load %arg5[%c0_12, %c0_13] : memref<128x128xf32, #tpu.memory_space<vmem>>, vector<128x128xf32>
    tpu.vector_store %arg5[%c0_12, %c0_13], %25 {strides = array<i32>} : memref<128x128xf32, #tpu.memory_space<vmem>>, vector<128x128xf32>,
    return
  }
  func.func @transform_0(%arg0: i32) -> (i32, i32) {
    %c0_i32 = arith.constant 0 : i32
    %c0_i32_0 = arith.constant 0 : i32
    return %arg0, %c0_i32 : i32, i32
  }
  func.func @transform_1(%arg0: i32) -> (i32, i32) {
    %c0_i32 = arith.constant 0 : i32
    %c0_i32_0 = arith.constant 0 : i32
    %c0_i32_1 = arith.constant 0 : i32
    return %c0_i32, %c0_i32_0 : i32, i32
  }
  func.func @transform_2(%arg0: i32) -> (i32, i32) {
    %c0_i32 = arith.constant 0 : i32
    %c0_i32_0 = arith.constant 0 : i32
    %c0_i32_1 = arith.constant 0 : i32
    return %c0_i32, %c0_i32_0 : i32, i32
  }
  func.func @transform_3(%arg0: i32) -> (i32, i32) {
    %c0_i32 = arith.constant 0 : i32
    %c0_i32_0 = arith.constant 0 : i32
    %c0_i32_1 = arith.constant 0 : i32
    return %c0_i32, %c0_i32_0 : i32, i32
  }
  func.func @transform_4(%arg0: i32) -> (i32, i32) {
    %c0_i32 = arith.constant 0 : i32
    %c0_i32_0 = arith.constant 0 : i32
    return %arg0, %c0_i32 : i32, i32
  }
}

</mosaic_0001>

<llo_original>
// kernel: _hrb_call.1
$region0: #{_hrb_call.1}
  #allocation0 [shape = 'u32[]', space=smem, size = 0x4, offset = 0x4, fixed_abs, tag = 'smem constant byte address 0x4 - core index']
  #allocation1 [shape = 'u32[144,128]{1,0:T(1,128)}', space=vmem, size = 0x12000, scoped, tag = 'internal scratch']
  %s0 = inlined_call_operand.hbm [shape: f32[256,128], index: 0, kind: input, shape index: {}]
  %s1 = inlined_call_operand.hbm [shape: f32[8,128], index: 1, kind: input, shape index: {}]
  %s2 = inlined_call_operand.hbm [shape: bf16[128,128], index: 2, kind: input, shape index: {}]
  %s3 = inlined_call_operand.hbm [shape: bf16[128,128], index: 3, kind: input, shape index: {}]
  %s4 = inlined_call_operand.hbm [shape: f32[256,128], index: 4, kind: output, shape index: {}]
  %s5 = sld [smem:[#allocation0]]
  $region65: #{_hrb_call.1} parent=0
    _
  %s7 = ssub.s32 1, %s5
  %s8 = scalar_select 0, %s7, %s5
  $region1: #{_hrb_call.1} parent=0
    #allocation2 [shape = 'u8[131072]{0}', space=vmem, size = 0x20000, scoped, tag = 'input window, operand 0']
    #allocation3 [shape = 's32[2]{0}', space=sflag, size = 0x8, scoped, tag = 'scoped memory for _hrb_call.1']
    #allocation4 [shape = 's32[2]{0}', space=sflag, size = 0x8, scoped, tag = 'scoped memory for _hrb_call.1']
    #allocation5 [shape = 'u8[4096]{0}', space=vmem, size = 0x1000, scoped, tag = 'input window, operand 1, single buffered']
    #allocation6 [shape = 's32[1]{0}', space=sflag, size = 0x4, scoped, tag = 'scoped memory for _hrb_call.1']
    #allocation7 [shape = 'u8[32768]{0}', space=vmem, size = 0x8000, scoped, tag = 'input window, operand 2, single buffered']
    #allocation8 [shape = 'u8[32768]{0}', space=vmem, size = 0x8000, scoped, tag = 'input window, operand 3, single buffered']
    #allocation9 [shape = 's32[1]{0}', space=sflag, size = 0x4, scoped, tag = 'scoped memory for _hrb_call.1']
    #allocation10 [shape = 'u8[131072]{0}', space=vmem, size = 0x20000, scoped, tag = 'output window, operand 0']
    %9 = vsyncpa [#allocation3], 0
    %s10 = scalar_lea.sflag [#allocation3], 1
    %11 = vsyncpa %s10, 0
    %12 = vsyncpa [#allocation6], 0
    %13 = vsyncpa [#allocation9], 0
    %14 = vsyncpa [#allocation4], 0
    %s15 = scalar_lea.sflag [#allocation4], 1
    %16 = vsyncpa %s15, 0
    loop: start=0, step=1, limit=4
    $region2: #{_hrb_call.1} parent=1 // loop_pre_header
      _
    $region3: #{_hrb_call.1} parent=1 // loop_header
      %s18 = sphi 0, %s22
      %p19 = scmp.ge.s32.totalorder %s18, 4
      %s28 = sphi 0, %s30
      %s31 = sphi 0, %s28
      %s32 = sphi 0, %s31
      %s48 = sphi 0, %s32
      %s52 = sphi 0, %s52
      %s54 = sphi 0, %s52
      %s55 = sphi 0, %s54
      %s69 = sphi 0, %s55
      %s73 = sphi 0, %s73
      %s75 = sphi 0, %s73
      %s76 = sphi 0, %s75
      %s90 = sphi 0, %s76
      %s94 = sphi 0, %s94
      %s96 = sphi 0, %s94
      %s97 = sphi 0, %s96
      %s111 = sphi 0, %s97
      %s117 = sphi 0, %s119
      %s120 = sphi 0, %s117
      %s121 = sphi 0, %s120
      %s137 = sphi 0, %s121
    $region4: #{_hrb_call.1} parent=1 // loop_header_branch
      %21 = sbr.rel (%p19) target = $region8
    $region5: #{_hrb_call.1} parent=1 // loop_body
      %s23 = ssub.s32 %s18, 1
      %s24 = ssub.s32 %s18, 2
      %s25 = sadd.s32 %s18, 1
      %s26 = ssub.s32 %s18, %s25
      %p27 = scmp.eq.s32.totalorder %s26, 0
      %s29 = sadd.s32 %s28, 1
      %s30 = scalar_select %p27, %s28, %s29
      %p33 = pneg %p27
      %p34 = scmp.eq.s32.totalorder %s18, 1
      %p35 = por %p33, %p34
      %p36 = scmp.ne.s32.totalorder %s28, %s31
      %p37 = scmp.eq.s32.totalorder %s18, 0
      %p38 = por %p36, %p37
      %p39 = scmp.ne.s32.totalorder %s28, %s31
      %p40 = scmp.eq.s32.totalorder %s23, 1
      %p41 = por %p39, %p40
      %p42 = scmp.ne.s32.totalorder %s31, %s32
      %p43 = scmp.eq.s32.totalorder %s23, 0
      %p44 = por %p42, %p43
      %p45 = scmp.ne.s32.totalorder %s31, %s32
      %p46 = scmp.eq.s32.totalorder %s24, 1
      %p47 = por %p45, %p46
      %p49 = scmp.ne.s32.totalorder %s32, %s48
      %p50 = scmp.eq.s32.totalorder %s24, 0
      %p51 = por %p49, %p50
      %s53 = sadd.s32 %s52, 1
      %p56 = scmp.eq.s32.totalorder %s18, 1
      %p57 = scmp.ne.s32.totalorder %s52, %s54
      %p58 = scmp.eq.s32.totalorder %s18, 0
      %p59 = por %p57, %p58
      %p60 = scmp.ne.s32.totalorder %s52, %s54
      %p61 = scmp.eq.s32.totalorder %s23, 1
      %p62 = por %p60, %p61
      %p63 = scmp.ne.s32.totalorder %s54, %s55
      %p64 = scmp.eq.s32.totalorder %s23, 0
      %p65 = por %p63, %p64
      %p66 = scmp.ne.s32.totalorder %s54, %s55
      %p67 = scmp.eq.s32.totalorder %s24, 1
      %p68 = por %p66, %p67
      %p70 = scmp.ne.s32.totalorder %s55, %s69
      %p71 = scmp.eq.s32.totalorder %s24, 0
      %p72 = por %p70, %p71
      %s74 = sadd.s32 %s73, 1
      %p77 = scmp.eq.s32.totalorder %s18, 1
      %p78 = scmp.ne.s32.totalorder %s73, %s75
      %p79 = scmp.eq.s32.totalorder %s18, 0
      %p80 = por %p78, %p79
      %p81 = scmp.ne.s32.totalorder %s73, %s75
      %p82 = scmp.eq.s32.totalorder %s23, 1
      %p83 = por %p81, %p82
      %p84 = scmp.ne.s32.totalorder %s75, %s76
      %p85 = scmp.eq.s32.totalorder %s23, 0
      %p86 = por %p84, %p85
      %p87 = scmp.ne.s32.totalorder %s75, %s76
      %p88 = scmp.eq.s32.totalorder %s24, 1
      %p89 = por %p87, %p88
      %p91 = scmp.ne.s32.totalorder %s76, %s90
      %p92 = scmp.eq.s32.totalorder %s24, 0
      %p93 = por %p91, %p92
      %s95 = sadd.s32 %s94, 1
      %p98 = scmp.eq.s32.totalorder %s18, 1
      %p99 = scmp.ne.s32.totalorder %s94, %s96
      %p100 = scmp.eq.s32.totalorder %s18, 0
      %p101 = por %p99, %p100
      %p102 = scmp.ne.s32.totalorder %s94, %s96
      %p103 = scmp.eq.s32.totalorder %s23, 1
      %p104 = por %p102, %p103
      %p105 = scmp.ne.s32.totalorder %s96, %s97
      %p106 = scmp.eq.s32.totalorder %s23, 0
      %p107 = por %p105, %p106
      %p108 = scmp.ne.s32.totalorder %s96, %s97
      %p109 = scmp.eq.s32.totalorder %s24, 1
      %p110 = por %p108, %p109
      %p112 = scmp.ne.s32.totalorder %s97, %s111
      %p113 = scmp.eq.s32.totalorder %s24, 0
      %p114 = por %p112, %p113
      %s115 = ssub.s32 %s18, %s25
      %p116 = scmp.eq.s32.totalorder %s115, 0
      %s118 = sadd.s32 %s117, 1
      %s119 = scalar_select %p116, %s117, %s118
      %p122 = pneg %p116
      %p123 = scmp.eq.s32.totalorder %s18, 1
      %p124 = por %p122, %p123
      %p125 = scmp.ne.s32.totalorder %s117, %s120
      %p126 = scmp.eq.s32.totalorder %s18, 0
      %p127 = por %p125, %p126
      %p128 = scmp.ne.s32.totalorder %s117, %s120
      %p129 = scmp.eq.s32.totalorder %s23, 1
      %p130 = por %p128, %p129
      %p131 = scmp.ne.s32.totalorder %s120, %s121
      %p132 = scmp.eq.s32.totalorder %s23, 0
      %p133 = por %p131, %p132
      %p134 = scmp.ne.s32.totalorder %s120, %s121
      %p135 = scmp.eq.s32.totalorder %s24, 1
      %p136 = por %p134, %p135
      %p138 = scmp.ne.s32.totalorder %s121, %s137
      %p139 = scmp.eq.s32.totalorder %s24, 0
      %p140 = por %p138, %p139
      %p141 = scmp.le.s32.totalorder 1, %s18
      %p142 = scmp.lt.s32.totalorder %s18, 3
      %p143 = pnand %p141, %p142
      %p144 = pneg %p143
      // Predicated region
      $region9: #{_hrb_call.1} parent=5 // pred_check
        _
      $region10: #{_hrb_call.1} parent=5 // pred_check_branch
        %146 = sbr.rel (%p143) target = $region12
      $region11: #{_hrb_call.1} parent=5 // pred_region
        %s147 = ssub.s32 %s18, 1
        // Predicated region
        $region13: #{_hrb_call.1} parent=11 // pred_check
          %p148 = pneg %p65
        $region14: #{_hrb_call.1} parent=11 // pred_check_branch
          %150 = sbr.rel (%p148) target = $region16
        $region15: #{_hrb_call.1} parent=11 // pred_region
          %s152 = ssub.s32 128, 128
          %153 = vsyncadd [#allocation6], %s152
          %s155 = sshll.u32 [#allocation5], 4
          %s156 = int_to_ptr.vmem [resolvable:$true] %s155
          %158 = dma.hbm_to_vmem [thread:$0]  %s1, 128, %s156, [#allocation6]
        $region16: #{_hrb_call.1} parent=11 // pred_fallthru
          _
        // Predicated region
        $region17: #{_hrb_call.1} parent=11 // pred_check
          %p159 = pneg %p86
        $region18: #{_hrb_call.1} parent=11 // pred_check_branch
          %161 = sbr.rel (%p159) target = $region20
        $region19: #{_hrb_call.1} parent=11 // pred_region
          %s163 = ssub.s32 1024, 1024
          %164 = vsyncadd [#allocation6], %s163
          %s165 = sshll.u32 [#allocation7], 4
          %s166 = int_to_ptr.vmem [resolvable:$true] %s165
          %171 = dma.hbm_to_vmem [thread:$0]  %s2, 1024, %s166, [#allocation6], 64, 64, 4
        $region20: #{_hrb_call.1} parent=11 // pred_fallthru
          _
        // Predicated region
        $region21: #{_hrb_call.1} parent=11 // pred_check
          %p172 = pneg %p107
        $region22: #{_hrb_call.1} parent=11 // pred_check_branch
          %174 = sbr.rel (%p172) target = $region24
        $region23: #{_hrb_call.1} parent=11 // pred_region
          %s176 = ssub.s32 1024, 1024
          %177 = vsyncadd [#allocation9], %s176
          %s178 = sshll.u32 [#allocation8], 4
          %s179 = int_to_ptr.vmem [resolvable:$true] %s178
          %184 = dma.hbm_to_vmem [thread:$0]  %s3, 1024, %s179, [#allocation9], 64, 64, 4
        $region24: #{_hrb_call.1} parent=11 // pred_fallthru
          _
      $region12: #{_hrb_call.1} parent=5 // pred_fallthru
        _
      %p185 = scmp.lt.s32.totalorder %s18, 2
      // Predicated region
      $region25: #{_hrb_call.1} parent=5 // pred_check
        %p186 = pneg %p185
      $region26: #{_hrb_call.1} parent=5 // pred_check_branch
        %188 = sbr.rel (%p186) target = $region28
      $region27: #{_hrb_call.1} parent=5 // pred_region
        // Predicated region
        $region29: #{_hrb_call.1} parent=27 // pred_check
          %p189 = pneg %p38
        $region30: #{_hrb_call.1} parent=27 // pred_check_branch
          %191 = sbr.rel (%p189) target = $region32
        $region31: #{_hrb_call.1} parent=27 // pred_region
          %s192 = sand.u32 %s28, 1
          %s193 = scalar_lea.sflag [#allocation3], %s192
          %s194 = sand.u32 %s28, 1
          %s195 = smul.addr %s194, 128
          %s196 = scalar_lea.vmem [#allocation2], %s195
          %s197 = smul.u32 16, %s18
          %s199 = ssub.s32 2048, 2048
          %200 = vsyncadd %s193, %s199
          %s201 = smul.addr %s197, 128
          %s202 = scalar_lea.hbm %s0, %s201
          %s203 = sshll.u32 %s196, 4
          %s204 = int_to_ptr.vmem [resolvable:$true] %s203
          %209 = dma.hbm_to_vmem [thread:$0]  %s202, 2048, %s204, %s193, 128, 128, 8
        $region32: #{_hrb_call.1} parent=27 // pred_fallthru
          _
      $region28: #{_hrb_call.1} parent=5 // pred_fallthru
        _
      %p210 = scmp.le.s32.totalorder 1, %s18
      %p211 = scmp.lt.s32.totalorder %s18, 3
      %p212 = pnand %p210, %p211
      %p213 = pneg %p212
      // Predicated region
      $region33: #{_hrb_call.1} parent=5 // pred_check
        _
      $region34: #{_hrb_call.1} parent=5 // pred_check_branch
        %215 = sbr.rel (%p212) target = $region36
      $region35: #{_hrb_call.1} parent=5 // pred_region
        %s216 = ssub.s32 %s18, 1
        %s217 = sand.u32 %s31, 1
        %s218 = scalar_lea.sflag [#allocation3], %s217
        %s219 = sand.u32 %s31, 1
        %s220 = smul.addr %s219, 128
        %s221 = scalar_lea.vmem [#allocation2], %s220
        // Predicated region
        $region37: #{_hrb_call.1} parent=35 // pred_check
          %p222 = pneg %p44
        $region38: #{_hrb_call.1} parent=35 // pred_check_branch
          %224 = sbr.rel (%p222) target = $region40
        $region39: #{_hrb_call.1} parent=35 // pred_region
          %225 = dma.done %s218, 2048
        $region40: #{_hrb_call.1} parent=35 // pred_fallthru
          _
        // Predicated region
        $region41: #{_hrb_call.1} parent=35 // pred_check
          %p226 = pneg %p65
        $region42: #{_hrb_call.1} parent=35 // pred_check_branch
          %228 = sbr.rel (%p226) target = $region44
        $region43: #{_hrb_call.1} parent=35 // pred_region
          %229 = dma.done [#allocation6], 128
        $region44: #{_hrb_call.1} parent=35 // pred_fallthru
          _
        // Predicated region
        $region45: #{_hrb_call.1} parent=35 // pred_check
          %p230 = pneg %p86
        $region46: #{_hrb_call.1} parent=35 // pred_check_branch
          %232 = sbr.rel (%p230) target = $region48
        $region47: #{_hrb_call.1} parent=35 // pred_region
          %233 = dma.done [#allocation6], 1024
        $region48: #{_hrb_call.1} parent=35 // pred_fallthru
          _
        // Predicated region
        $region49: #{_hrb_call.1} parent=35 // pred_check
          %p234 = pneg %p107
        $region50: #{_hrb_call.1} parent=35 // pred_check_branch
          %236 = sbr.rel (%p234) target = $region52
        $region51: #{_hrb_call.1} parent=35 // pred_region
          %237 = dma.done [#allocation9], 1024
        $region52: #{_hrb_call.1} parent=35 // pred_fallthru
          _
        %s238 = sand.u32 %s31, 1
        %s239 = scalar_lea.sflag [#allocation3], %s238
        %s240 = sand.u32 %s31, 1
        %s241 = smul.addr %s240, 128
        %s242 = scalar_lea.vmem [#allocation2], %s241
        %p243 = pneg %p44
        %p244 = pneg %p41
        %p245 = pneg %p65
        %p246 = pneg %p62
        %p247 = pneg %p86
        %p248 = pneg %p83
        %p249 = pneg %p107
        %p250 = pneg %p104
        %p251 = pneg %p133
        %p252 = pneg %p130
        %s253 = sand.u32 %s120, 1
        %s254 = scalar_lea.sflag [#allocation4], %s253
        %s255 = sand.u32 %s120, 1
        %s256 = smul.addr %s255, 128
        %s257 = scalar_lea.vmem [#allocation10], %s256
        %s258 = smul.u32 16, %s23
        %s259 = smul.u32 16, %s23
        %v261 = vld [vmem:[#allocation5] sm:$0xff]
        %v262 = vld [vmem:[%s221] sm:$0xff]
        %v263 = vld [vmem:[%s221 + $0x8] sm:$0xff]
        %v264 = vld [vmem:[%s221 + $0x10] sm:$0xff]
        %v265 = vld [vmem:[%s221 + $0x18] sm:$0xff]
        %v266 = vld [vmem:[%s221 + $0x20] sm:$0xff]
        %v267 = vld [vmem:[%s221 + $0x28] sm:$0xff]
        %v268 = vld [vmem:[%s221 + $0x30] sm:$0xff]
        %v269 = vld [vmem:[%s221 + $0x38] sm:$0xff]
        %v270 = vld [vmem:[%s221 + $0x40] sm:$0xff]
        %v271 = vld [vmem:[%s221 + $0x48] sm:$0xff]
        %v272 = vld [vmem:[%s221 + $0x50] sm:$0xff]
        %v273 = vld [vmem:[%s221 + $0x58] sm:$0xff]
        %v274 = vld [vmem:[%s221 + $0x60] sm:$0xff]
        %v275 = vld [vmem:[%s221 + $0x68] sm:$0xff]
        %v276 = vld [vmem:[%s221 + $0x70] sm:$0xff]
        %v277 = vld [vmem:[%s221 + $0x78] sm:$0xff]
        %v278 = vlaneseq
        %v279 = vshrl.u32 %v278, 7
        %v280 = vsub.s32 0, %v279
        %v281 = vrot.slane %v261, %v280
        %v282 = vmul.f32 %v262, %v281
        %v283 = vmul.f32 %v263, %v281
        %v284 = vmul.f32 %v264, %v281
        %v285 = vmul.f32 %v265, %v281
        %v286 = vmul.f32 %v266, %v281
        %v287 = vmul.f32 %v267, %v281
        %v288 = vmul.f32 %v268, %v281
        %v289 = vmul.f32 %v269, %v281
        %v290 = vmul.f32 %v270, %v281
        %v291 = vmul.f32 %v271, %v281
        %v292 = vmul.f32 %v272, %v281
        %v293 = vmul.f32 %v273, %v281
        %v294 = vmul.f32 %v274, %v281
        %v295 = vmul.f32 %v275, %v281
        %v296 = vmul.f32 %v276, %v281
        %v297 = vmul.f32 %v277, %v281
        %v298 = vlaneseq
        %v299 = vshrl.u32 %v298, 7
        %v300 = vsub.s32 1, %v299
        %v301 = vrot.slane %v261, %v300
        %v302 = vadd.f32 %v282, %v301
        %v303 = vadd.f32 %v283, %v301
        %v304 = vadd.f32 %v284, %v301
        %v305 = vadd.f32 %v285, %v301
        %v306 = vadd.f32 %v286, %v301
        %v307 = vadd.f32 %v287, %v301
        %v308 = vadd.f32 %v288, %v301
        %v309 = vadd.f32 %v289, %v301
        %v310 = vadd.f32 %v290, %v301
        %v311 = vadd.f32 %v291, %v301
        %v312 = vadd.f32 %v292, %v301
        %v313 = vadd.f32 %v293, %v301
        %v314 = vadd.f32 %v294, %v301
        %v315 = vadd.f32 %v295, %v301
        %v316 = vadd.f32 %v296, %v301
        %v317 = vadd.f32 %v297, %v301
        %v318 = vmax.f32 %v302, 0.0
        %v319 = vmax.f32 %v303, 0.0
        %v320 = vmax.f32 %v304, 0.0
        %v321 = vmax.f32 %v305, 0.0
        %v322 = vmax.f32 %v306, 0.0
        %v323 = vmax.f32 %v307, 0.0
        %v324 = vmax.f32 %v308, 0.0
        %v325 = vmax.f32 %v309, 0.0
        %v326 = vmax.f32 %v310, 0.0
        %v327 = vmax.f32 %v311, 0.0
        %v328 = vmax.f32 %v312, 0.0
        %v329 = vmax.f32 %v313, 0.0
        %v330 = vmax.f32 %v314, 0.0
        %v331 = vmax.f32 %v315, 0.0
        %v332 = vmax.f32 %v316, 0.0
        %v333 = vmax.f32 %v317, 0.0
        %v334 = vpack.c.bf16 %v319, %v318
        %v335 = vpack.c.bf16 %v321, %v320
        %v336 = vpack.c.bf16 %v323, %v322
        %v337 = vpack.c.bf16 %v325, %v324
        %v338 = vpack.c.bf16 %v327, %v326
        %v339 = vpack.c.bf16 %v329, %v328
        %v340 = vpack.c.bf16 %v331, %v330
        %v341 = vpack.c.bf16 %v333, %v332
        %v342 = vld [vmem:[#allocation7] sm:$0xf]
        %v343 = vld [vmem:[#allocation7 + $0x4] sm:$0xf]
        %v344 = vld [vmem:[#allocation7 + $0x8] sm:$0xf]
        %v345 = vld [vmem:[#allocation7 + $0xc] sm:$0xf]
        %v346 = vld [vmem:[#allocation7 + $0x10] sm:$0xf]
        %v347 = vld [vmem:[#allocation7 + $0x14] sm:$0xf]
        %v348 = vld [vmem:[#allocation7 + $0x18] sm:$0xf]
        %v349 = vld [vmem:[#allocation7 + $0x1c] sm:$0xf]
        %v350 = vld [vmem:[#allocation7 + $0x20] sm:$0xf]
        %v351 = vld [vmem:[#allocation7 + $0x24] sm:$0xf]
        %v352 = vld [vmem:[#allocation7 + $0x28] sm:$0xf]
        %v353 = vld [vmem:[#allocation7 + $0x2c] sm:$0xf]
        %v354 = vld [vmem:[#allocation7 + $0x30] sm:$0xf]
        %v355 = vld [vmem:[#allocation7 + $0x34] sm:$0xf]
        %v356 = vld [vmem:[#allocation7 + $0x38] sm:$0xf]
        %v357 = vld [vmem:[#allocation7 + $0x3c] sm:$0xf]
        %v358 = vlaneseq
        %v359 = vshrl.u32 %v358, 7
        %v360 = vsub.s32 2, %v359
        %v361 = vrot.slane %v261, %v360
        %v378 = vunpack.c.l.b16 %v342
        %v379 = vunpack.c.l.b16 %v343
        %v380 = vunpack.c.l.b16 %v344
        %v381 = vunpack.c.l.b16 %v345
        %v382 = vunpack.c.l.b16 %v346
        %v383 = vunpack.c.l.b16 %v347
        %v384 = vunpack.c.l.b16 %v348
        %v385 = vunpack.c.l.b16 %v349
        %v386 = vunpack.c.l.b16 %v350
        %v387 = vunpack.c.l.b16 %v351
        %v388 = vunpack.c.l.b16 %v352
        %v389 = vunpack.c.l.b16 %v353
        %v390 = vunpack.c.l.b16 %v354
        %v391 = vunpack.c.l.b16 %v355
        %v392 = vunpack.c.l.b16 %v356
        %v393 = vunpack.c.l.b16 %v357
        %v394 = vpack.c.b16 %v379, %v378
        %v395 = vpack.c.b16 %v381, %v380
        %v396 = vpack.c.b16 %v383, %v382
        %v397 = vpack.c.b16 %v385, %v384
        %v398 = vpack.c.b16 %v387, %v386
        %v399 = vpack.c.b16 %v389, %v388
        %v400 = vpack.c.b16 %v391, %v390
        %v401 = vpack.c.b16 %v393, %v392
        %410 = vmatprep.subr.bf16.mxu0 0
        %411 = vmatpush1.bf16.msra.mxu0 %v394
        %412 = vmatprep.subr.bf16.mxu0 0
        %413 = vmatpush1.bf16.msra.mxu0 %v395
        %414 = vmatprep.subr.bf16.mxu0 0
        %415 = vmatpush1.bf16.msra.mxu0 %v396
        %416 = vmatprep.subr.bf16.mxu0 0
        %417 = vmatpush1.bf16.msra.mxu0 %v397
        %418 = vmatprep.subr.bf16.mxu0 0
        %419 = vmatpush1.bf16.msra.mxu0 %v398
        %420 = vmatprep.subr.bf16.mxu0 0
        %421 = vmatpush1.bf16.msra.mxu0 %v399
        %422 = vmatprep.subr.bf16.mxu0 0
        %423 = vmatpush1.bf16.msra.mxu0 %v400
        %424 = vmatprep.subr.bf16.mxu0 0
        %425 = vmatpush1.bf16.msra.mxu0 %v401
        %426 = vmatprep.subr.bf16.mxu0 0
        %427 = vmatpush1.bf16.msra.mxu0 0
        %428 = vmatprep.subr.bf16.mxu0 0
        %429 = vmatpush1.bf16.msra.mxu0 0
        %430 = vmatprep.subr.bf16.mxu0 0
        %431 = vmatpush1.bf16.msra.mxu0 0
        %432 = vmatprep.subr.bf16.mxu0 0
        %433 = vmatpush1.bf16.msra.mxu0 0
        %434 = vmatprep.subr.bf16.mxu0 0
        %435 = vmatpush1.bf16.msra.mxu0 0
        %436 = vmatprep.subr.bf16.mxu0 0
        %437 = vmatpush1.bf16.msra.mxu0 0
        %438 = vmatprep.subr.bf16.mxu0 0
        %439 = vmatpush1.bf16.msra.mxu0 0
        %440 = vmatprep.subr.bf16.mxu0 0
        %441 = vmatpush1.bf16.msra.mxu0 0
        %442 = vmatprep.mubr.bf16.mxu0 0
        %443 = vmatmul.mubr.bf16.gmra.mrb[0].mxu0 %v334
        %v444 = vpop.f32.mrb[0].mxu0
        %v445 = vadd.f32 %v361, %v444
        %v446 = vpop.f32.mrb[0].mxu0
        %v447 = vpop.f32.mrb[0].mxu0
        %v448 = vadd.f32 %v361, %v447
        %v449 = vpop.f32.mrb[0].mxu0
        %450 = vmatprep.mubr.bf16.mxu0 0
        %451 = vmatmul.mubr.bf16.gmra.mrb[0].mxu0 %v335
        %v452 = vpop.f32.mrb[0].mxu0
        %v453 = vadd.f32 %v361, %v452
        %v454 = vpop.f32.mrb[0].mxu0
        %v455 = vpop.f32.mrb[0].mxu0
        %v456 = vadd.f32 %v361, %v455
        %v457 = vpop.f32.mrb[0].mxu0
        %458 = vmatprep.mubr.bf16.mxu0 0
        %459 = vmatmul.mubr.bf16.gmra.mrb[0].mxu0 %v336
        %v460 = vpop.f32.mrb[0].mxu0
        %v461 = vadd.f32 %v361, %v460
        %v462 = vpop.f32.mrb[0].mxu0
        %v463 = vpop.f32.mrb[0].mxu0
        %v464 = vadd.f32 %v361, %v463
        %v465 = vpop.f32.mrb[0].mxu0
        %466 = vmatprep.mubr.bf16.mxu0 0
        %467 = vmatmul.mubr.bf16.gmra.mrb[0].mxu0 %v337
        %v468 = vpop.f32.mrb[0].mxu0
        %v469 = vadd.f32 %v361, %v468
        %v470 = vpop.f32.mrb[0].mxu0
        %v471 = vpop.f32.mrb[0].mxu0
        %v472 = vadd.f32 %v361, %v471
        %v473 = vpop.f32.mrb[0].mxu0
        %474 = vmatprep.mubr.bf16.mxu0 0
        %475 = vmatmul.mubr.bf16.gmra.mrb[0].mxu0 %v338
        %v476 = vpop.f32.mrb[0].mxu0
        %v477 = vadd.f32 %v361, %v476
        %v478 = vpop.f32.mrb[0].mxu0
        %v479 = vpop.f32.mrb[0].mxu0
        %v480 = vadd.f32 %v361, %v479
        %v481 = vpop.f32.mrb[0].mxu0
        %482 = vmatprep.mubr.bf16.mxu0 0
        %483 = vmatmul.mubr.bf16.gmra.mrb[0].mxu0 %v339
        %v484 = vpop.f32.mrb[0].mxu0
        %v485 = vadd.f32 %v361, %v484
        %v486 = vpop.f32.mrb[0].mxu0
        %v487 = vpop.f32.mrb[0].mxu0
        %v488 = vadd.f32 %v361, %v487
        %v489 = vpop.f32.mrb[0].mxu0
        %490 = vmatprep.mubr.bf16.mxu0 0
        %491 = vmatmul.mubr.bf16.gmra.mrb[0].mxu0 %v340
        %v492 = vpop.f32.mrb[0].mxu0
        %v493 = vadd.f32 %v361, %v492
        %v494 = vpop.f32.mrb[0].mxu0
        %v495 = vpop.f32.mrb[0].mxu0
        %v496 = vadd.f32 %v361, %v495
        %v497 = vpop.f32.mrb[0].mxu0
        %498 = vmatprep.mubr.bf16.mxu0 0
        %499 = vmatmul.mubr.bf16.gmra.mrb[0].mxu0 %v341
        %v500 = vpop.f32.mrb[0].mxu0
        %v501 = vadd.f32 %v361, %v500
        %v502 = vpop.f32.mrb[0].mxu0
        %v503 = vpop.f32.mrb[0].mxu0
        %v504 = vadd.f32 %v361, %v503
        %v505 = vpop.f32.mrb[0].mxu0
        %506 = vdwg.mxu0
        %v507 = vmax.f32 %v445, 0.0
        %v508 = vmax.f32 %v448, 0.0
        %v509 = vmax.f32 %v453, 0.0
        %v510 = vmax.f32 %v456, 0.0
        %v511 = vmax.f32 %v461, 0.0
        %v512 = vmax.f32 %v464, 0.0
        %v513 = vmax.f32 %v469, 0.0
        %v514 = vmax.f32 %v472, 0.0
        %v515 = vmax.f32 %v477, 0.0
        %v516 = vmax.f32 %v480, 0.0
        %v517 = vmax.f32 %v485, 0.0
        %v518 = vmax.f32 %v488, 0.0
        %v519 = vmax.f32 %v493, 0.0
        %v520 = vmax.f32 %v496, 0.0
        %v521 = vmax.f32 %v501, 0.0
        %v522 = vmax.f32 %v504, 0.0
        %v523 = vpack.c.bf16 %v508, %v507
        %v524 = vpack.c.bf16 %v510, %v509
        %v525 = vpack.c.bf16 %v512, %v511
        %v526 = vpack.c.bf16 %v514, %v513
        %v527 = vpack.c.bf16 %v516, %v515
        %v528 = vpack.c.bf16 %v518, %v517
        %v529 = vpack.c.bf16 %v520, %v519
        %v530 = vpack.c.bf16 %v522, %v521
        %v531 = vld [vmem:[#allocation8] sm:$0xf]
        %v532 = vld [vmem:[#allocation8 + $0x4] sm:$0xf]
        %v533 = vld [vmem:[#allocation8 + $0x8] sm:$0xf]
        %v534 = vld [vmem:[#allocation8 + $0xc] sm:$0xf]
        %v535 = vld [vmem:[#allocation8 + $0x10] sm:$0xf]
        %v536 = vld [vmem:[#allocation8 + $0x14] sm:$0xf]
        %v537 = vld [vmem:[#allocation8 + $0x18] sm:$0xf]
        %v538 = vld [vmem:[#allocation8 + $0x1c] sm:$0xf]
        %v539 = vld [vmem:[#allocation8 + $0x20] sm:$0xf]
        %v540 = vld [vmem:[#allocation8 + $0x24] sm:$0xf]
        %v541 = vld [vmem:[#allocation8 + $0x28] sm:$0xf]
        %v542 = vld [vmem:[#allocation8 + $0x2c] sm:$0xf]
        %v543 = vld [vmem:[#allocation8 + $0x30] sm:$0xf]
        %v544 = vld [vmem:[#allocation8 + $0x34] sm:$0xf]
        %v545 = vld [vmem:[#allocation8 + $0x38] sm:$0xf]
        %v546 = vld [vmem:[#allocation8 + $0x3c] sm:$0xf]
        %v547 = vlaneseq
        %v548 = vshrl.u32 %v547, 7
        %v549 = vsub.s32 3, %v548
        %v550 = vrot.slane %v261, %v549
        %v567 = vunpack.c.l.b16 %v531
        %v568 = vunpack.c.l.b16 %v532
        %v569 = vunpack.c.l.b16 %v533
        %v570 = vunpack.c.l.b16 %v534
        %v571 = vunpack.c.l.b16 %v535
        %v572 = vunpack.c.l.b16 %v536
        %v573 = vunpack.c.l.b16 %v537
        %v574 = vunpack.c.l.b16 %v538
        %v575 = vunpack.c.l.b16 %v539
        %v576 = vunpack.c.l.b16 %v540
        %v577 = vunpack.c.l.b16 %v541
        %v578 = vunpack.c.l.b16 %v542
        %v579 = vunpack.c.l.b16 %v543
        %v580 = vunpack.c.l.b16 %v544
        %v581 = vunpack.c.l.b16 %v545
        %v582 = vunpack.c.l.b16 %v546
        %v583 = vpack.c.b16 %v568, %v567
        %v584 = vpack.c.b16 %v570, %v569
        %v585 = vpack.c.b16 %v572, %v571
        %v586 = vpack.c.b16 %v574, %v573
        %v587 = vpack.c.b16 %v576, %v575
        %v588 = vpack.c.b16 %v578, %v577
        %v589 = vpack.c.b16 %v580, %v579
        %v590 = vpack.c.b16 %v582, %v581
        %599 = vmatprep.subr.bf16.mxu0 0
        %600 = vmatpush1.bf16.msra.mxu0 %v583
        %601 = vmatprep.subr.bf16.mxu0 0
        %602 = vmatpush1.bf16.msra.mxu0 %v584
        %603 = vmatprep.subr.bf16.mxu0 0
        %604 = vmatpush1.bf16.msra.mxu0 %v585
        %605 = vmatprep.subr.bf16.mxu0 0
        %606 = vmatpush1.bf16.msra.mxu0 %v586
        %607 = vmatprep.subr.bf16.mxu0 0
        %608 = vmatpush1.bf16.msra.mxu0 %v587
        %609 = vmatprep.subr.bf16.mxu0 0
        %610 = vmatpush1.bf16.msra.mxu0 %v588
        %611 = vmatprep.subr.bf16.mxu0 0
        %612 = vmatpush1.bf16.msra.mxu0 %v589
        %613 = vmatprep.subr.bf16.mxu0 0
        %614 = vmatpush1.bf16.msra.mxu0 %v590
        %615 = vmatprep.subr.bf16.mxu0 0
        %616 = vmatpush1.bf16.msra.mxu0 0
        %617 = vmatprep.subr.bf16.mxu0 0
        %618 = vmatpush1.bf16.msra.mxu0 0
        %619 = vmatprep.subr.bf16.mxu0 0
        %620 = vmatpush1.bf16.msra.mxu0 0
        %621 = vmatprep.subr.bf16.mxu0 0
        %622 = vmatpush1.bf16.msra.mxu0 0
        %623 = vmatprep.subr.bf16.mxu0 0
        %624 = vmatpush1.bf16.msra.mxu0 0
        %625 = vmatprep.subr.bf16.mxu0 0
        %626 = vmatpush1.bf16.msra.mxu0 0
        %627 = vmatprep.subr.bf16.mxu0 0
        %628 = vmatpush1.bf16.msra.mxu0 0
        %629 = vmatprep.subr.bf16.mxu0 0
        %630 = vmatpush1.bf16.msra.mxu0 0
        %631 = vmatprep.mubr.bf16.mxu0 0
        %632 = vmatmul.mubr.bf16.gmra.mrb[0].mxu0 %v523
        %v633 = vpop.f32.mrb[0].mxu0
        %v634 = vadd.f32 %v550, %v633
        %v635 = vpop.f32.mrb[0].mxu0
        %v636 = vpop.f32.mrb[0].mxu0
        %v637 = vadd.f32 %v550, %v636
        %v638 = vpop.f32.mrb[0].mxu0
        %639 = vmatprep.mubr.bf16.mxu0 0
        %640 = vmatmul.mubr.bf16.gmra.mrb[0].mxu0 %v524
        %v641 = vpop.f32.mrb[0].mxu0
        %v642 = vadd.f32 %v550, %v641
        %v643 = vpop.f32.mrb[0].mxu0
        %v644 = vpop.f32.mrb[0].mxu0
        %v645 = vadd.f32 %v550, %v644
        %v646 = vpop.f32.mrb[0].mxu0
        %647 = vmatprep.mubr.bf16.mxu0 0
        %648 = vmatmul.mubr.bf16.gmra.mrb[0].mxu0 %v525
        %v649 = vpop.f32.mrb[0].mxu0
        %v650 = vadd.f32 %v550, %v649
        %v651 = vpop.f32.mrb[0].mxu0
        %v652 = vpop.f32.mrb[0].mxu0
        %v653 = vadd.f32 %v550, %v652
        %v654 = vpop.f32.mrb[0].mxu0
        %655 = vmatprep.mubr.bf16.mxu0 0
        %656 = vmatmul.mubr.bf16.gmra.mrb[0].mxu0 %v526
        %v657 = vpop.f32.mrb[0].mxu0
        %v658 = vadd.f32 %v550, %v657
        %v659 = vpop.f32.mrb[0].mxu0
        %v660 = vpop.f32.mrb[0].mxu0
        %v661 = vadd.f32 %v550, %v660
        %v662 = vpop.f32.mrb[0].mxu0
        %663 = vmatprep.mubr.bf16.mxu0 0
        %664 = vmatmul.mubr.bf16.gmra.mrb[0].mxu0 %v527
        %v665 = vpop.f32.mrb[0].mxu0
        %v666 = vadd.f32 %v550, %v665
        %v667 = vpop.f32.mrb[0].mxu0
        %v668 = vpop.f32.mrb[0].mxu0
        %v669 = vadd.f32 %v550, %v668
        %v670 = vpop.f32.mrb[0].mxu0
        %671 = vmatprep.mubr.bf16.mxu0 0
        %672 = vmatmul.mubr.bf16.gmra.mrb[0].mxu0 %v528
        %v673 = vpop.f32.mrb[0].mxu0
        %v674 = vadd.f32 %v550, %v673
        %v675 = vpop.f32.mrb[0].mxu0
        %v676 = vpop.f32.mrb[0].mxu0
        %v677 = vadd.f32 %v550, %v676
        %v678 = vpop.f32.mrb[0].mxu0
        %679 = vmatprep.mubr.bf16.mxu0 0
        %680 = vmatmul.mubr.bf16.gmra.mrb[0].mxu0 %v529
        %v681 = vpop.f32.mrb[0].mxu0
        %v682 = vadd.f32 %v550, %v681
        %v683 = vpop.f32.mrb[0].mxu0
        %v684 = vpop.f32.mrb[0].mxu0
        %v685 = vadd.f32 %v550, %v684
        %v686 = vpop.f32.mrb[0].mxu0
        %687 = vmatprep.mubr.bf16.mxu0 0
        %688 = vmatmul.mubr.bf16.gmra.mrb[0].mxu0 %v530
        %v689 = vpop.f32.mrb[0].mxu0
        %v690 = vadd.f32 %v550, %v689
        %v691 = vpop.f32.mrb[0].mxu0
        %v692 = vpop.f32.mrb[0].mxu0
        %v693 = vadd.f32 %v550, %v692
        %v694 = vpop.f32.mrb[0].mxu0
        %695 = vdwg.mxu0
        %v696 = vadd.f32 %v634, %v262
        %v697 = vadd.f32 %v637, %v263
        %v698 = vadd.f32 %v642, %v264
        %v699 = vadd.f32 %v645, %v265
        %v700 = vadd.f32 %v650, %v266
        %v701 = vadd.f32 %v653, %v267
        %v702 = vadd.f32 %v658, %v268
        %v703 = vadd.f32 %v661, %v269
        %v704 = vadd.f32 %v666, %v270
        %v705 = vadd.f32 %v669, %v271
        %v706 = vadd.f32 %v674, %v272
        %v707 = vadd.f32 %v677, %v273
        %v708 = vadd.f32 %v682, %v274
        %v709 = vadd.f32 %v685, %v275
        %v710 = vadd.f32 %v690, %v276
        %v711 = vadd.f32 %v693, %v277
        %712 = vst [vmem:[%s257] sm:$0xff] %v696
        %713 = vst [vmem:[%s257 + $0x8] sm:$0xff] %v697
        %714 = vst [vmem:[%s257 + $0x10] sm:$0xff] %v698
        %715 = vst [vmem:[%s257 + $0x18] sm:$0xff] %v699
        %716 = vst [vmem:[%s257 + $0x20] sm:$0xff] %v700
        %717 = vst [vmem:[%s257 + $0x28] sm:$0xff] %v701
        %718 = vst [vmem:[%s257 + $0x30] sm:$0xff] %v702
        %719 = vst [vmem:[%s257 + $0x38] sm:$0xff] %v703
        %720 = vst [vmem:[%s257 + $0x40] sm:$0xff] %v704
        %721 = vst [vmem:[%s257 + $0x48] sm:$0xff] %v705
        %722 = vst [vmem:[%s257 + $0x50] sm:$0xff] %v706
        %723 = vst [vmem:[%s257 + $0x58] sm:$0xff] %v707
        %724 = vst [vmem:[%s257 + $0x60] sm:$0xff] %v708
        %725 = vst [vmem:[%s257 + $0x68] sm:$0xff] %v709
        %726 = vst [vmem:[%s257 + $0x70] sm:$0xff] %v710
        %727 = vst [vmem:[%s257 + $0x78] sm:$0xff] %v711
        %s728 = sand.u32 %s120, 1
        %s729 = scalar_lea.sflag [#allocation4], %s728
        %s730 = sand.u32 %s120, 1
        %s731 = smul.addr %s730, 128
        %s732 = scalar_lea.vmem [#allocation10], %s731
        // Predicated region
        $region53: #{_hrb_call.1} parent=35 // pred_check
          %p733 = pneg %p130
        $region54: #{_hrb_call.1} parent=35 // pred_check_branch
          %735 = sbr.rel (%p733) target = $region56
        $region55: #{_hrb_call.1} parent=35 // pred_region
          %s736 = smul.u32 16, %s23
          %s738 = ssub.s32 2048, 2048
          %739 = vsyncadd %s729, %s738
          %s740 = smul.addr %s736, 128
          %s741 = scalar_lea.hbm %s4, %s740
          %s742 = sshll.u32 %s732, 4
          %s743 = int_to_ptr.vmem [resolvable:$true] %s742
          %748 = dma.vmem_to_hbm [thread:$0]  %s743, 2048, %s741, %s729, 128, 128, 8
        $region56: #{_hrb_call.1} parent=35 // pred_fallthru
          _
      $region36: #{_hrb_call.1} parent=5 // pred_fallthru
        _
      %p749 = scmp.le.s32.totalorder 2, %s18
      // Predicated region
      $region57: #{_hrb_call.1} parent=5 // pred_check
        %p750 = pneg %p749
      $region58: #{_hrb_call.1} parent=5 // pred_check_branch
        %752 = sbr.rel (%p750) target = $region60
      $region59: #{_hrb_call.1} parent=5 // pred_region
        %s753 = ssub.s32 %s18, 2
        // Predicated region
        $region61: #{_hrb_call.1} parent=59 // pred_check
          %p754 = pneg %p136
        $region62: #{_hrb_call.1} parent=59 // pred_check_branch
          %756 = sbr.rel (%p754) target = $region64
        $region63: #{_hrb_call.1} parent=59 // pred_region
          %s757 = sand.u32 %s121, 1
          %s758 = scalar_lea.sflag [#allocation4], %s757
          %s759 = sand.u32 %s121, 1
          %s760 = smul.addr %s759, 128
          %s761 = scalar_lea.vmem [#allocation10], %s760
          %762 = dma.done %s758, 2048
        $region64: #{_hrb_call.1} parent=59 // pred_fallthru
          _
      $region60: #{_hrb_call.1} parent=5 // pred_fallthru
        _
    $region6: #{_hrb_call.1} parent=1 // loop_footer
      %s22 = sadd.s32 1, %s18
    $region7: #{_hrb_call.1} parent=1 // loop_footer_branch
      %17 = sbr.rel target = $region3
    $region8: #{_hrb_call.1} parent=1 // loop_exit
      _
    %763 = vsyncpa [#allocation3], 1
    %s764 = scalar_lea.sflag [#allocation3], 1
    %765 = vsyncpa %s764, 1
    %766 = vsyncpa [#allocation6], 1
    %767 = vsyncpa [#allocation9], 1
    %768 = vsyncpa [#allocation4], 1
    %s769 = scalar_lea.sflag [#allocation4], 1
    %770 = vsyncpa %s769, 1

</llo_original>
